<compile_context>
chip_gen: v7x
topology: tpu7x:2x2x1
jax: 0.10.0
libtpu: 0.0.40
codegen_flags: <defaults>
</compile_context>

<pallas_src>
import jax
import jax.numpy as jnp
from jax import lax
from jax.experimental import pallas as pl
from jax.experimental.pallas import tpu as pltpu


# --------------------------------------------------------------------------- #
# Kernel
# --------------------------------------------------------------------------- #
def _conv3x3_s2_bn_relu_kernel(ymain_ref, yhalo_ref, w_ref, scale_ref, bias_ref,
                               o_ref):
    """One (batch, row-band) tile of Conv3x3/s2/p1 + BN(eval) + ReLU.

    ymain_ref : (1, TH, Wo+1, 4*Cin)  space-to-depth rows [t*TH, t*TH+TH)
    yhalo_ref : (1, 1,  Wo+1, 4*Cin)  space-to-depth row   t*TH+TH  (halo)
    w_ref     : (16*Cin, Cout)        im2col-packed conv weight (raw, no BN)
    scale_ref : (1, Cout) f32         gamma / sqrt(var + eps)
    bias_ref  : (1, Cout) f32         (conv_b - mean) * scale + beta
    o_ref     : (1, TH, Wo, Cout)     output tile, channels-last
    """
    TH, Wo, Cout = o_ref.shape[1], o_ref.shape[2], o_ref.shape[3]
    Cs = ymain_ref.shape[3]                                   # 4 * Cin

    main = ymain_ref[0]                                       # (TH, Wo+1, Cs)
    halo = yhalo_ref[0]                                       # (1,  Wo+1, Cs)
    # Row band for the dh=1 taps (s2d rows t*TH+1 .. t*TH+TH): one major-dim
    # copy (~1x band), replacing the old full-band + 4x lane-concat copies.
    shifted = jnp.concatenate([main[1:], halo], axis=0) if TH > 1 else halo

    # Four accumulating MXU matmuls, one per (dh, dw) tap of the equivalent
    # stride-1 2x2 conv over the space-to-depth input (no im2col lane concat).
    acc = None
    for k, (band, dw) in enumerate(((main, 0), (main, 1),
                                    (shifted, 0), (shifted, 1))):
        lhs = band[:, dw:dw + Wo, :].reshape(TH * Wo, Cs)
        part = jnp.dot(lhs, w_ref[k * Cs:(k + 1) * Cs, :],
                       preferred_element_type=jnp.float32)
        acc = part if acc is None else acc + part

    # BatchNorm (inference) + ReLU epilogue on the f32 accumulator.
    y = jnp.maximum(acc * scale_ref[...] + bias_ref[...], 0.0)
    o_ref[0] = y.reshape(TH, Wo, Cout).astype(o_ref.dtype)


# --------------------------------------------------------------------------- #
# Single-buffered constant operands (pipeline_mode=pl.Buffered(1)), probed once
# --------------------------------------------------------------------------- #
_BUFFERED1_OK = None


def _buffered_const_supported():
    """True iff this Pallas build accepts pipeline_mode=pl.Buffered(1)."""
    global _BUFFERED1_OK
    if _BUFFERED1_OK is None:
        try:
            def _probe(c_ref, x_ref, o_ref):
                o_ref[...] = x_ref[...] + c_ref[...]

            f = pl.pallas_call(
                _probe,
                out_shape=jax.ShapeDtypeStruct((8, 128), jnp.float32),
                grid_spec=pltpu.PrefetchScalarGridSpec(
                    num_scalar_prefetch=0,
                    grid=(2,),
                    in_specs=[
                        pl.BlockSpec((8, 128), lambda i: (0, 0),
                                     pipeline_mode=pl.Buffered(1)),
                        pl.BlockSpec((8, 128), lambda i: (0, 0)),
                    ],
                    out_specs=pl.BlockSpec((8, 128), lambda i: (0, 0))),
                compiler_params=pltpu.CompilerParams(
                    dimension_semantics=("arbitrary",)),
            )
            res = jax.block_until_ready(
                f(jnp.zeros((8, 128), jnp.float32),
                  jnp.ones((8, 128), jnp.float32)))
            _BUFFERED1_OK = bool(jnp.all(res == 1.0))
        except Exception:
            _BUFFERED1_OK = False
    return _BUFFERED1_OK


def _const_spec(block_shape):
    """BlockSpec for a grid-invariant operand; single-buffered if supported."""
    idx = lambda b, t: (0,) * len(block_shape)
    if _buffered_const_supported():
        return pl.BlockSpec(block_shape, idx, pipeline_mode=pl.Buffered(1))
    return pl.BlockSpec(block_shape, idx)


# --------------------------------------------------------------------------- #
# VMEM budgeting (honest per-step footprint, generation aware)
# --------------------------------------------------------------------------- #
def _vmem_footprint(th, w_pad, cs, cout, in_isz, out_isz, weight_bufs):
    wo = w_pad - 1
    band = th * w_pad * cs * in_isz            # one input row band
    halo = w_pad * cs * in_isz                 # one halo row
    outb = th * wo * cout * out_isz            # one output block
    accs = th * wo * cout * 4                  # f32 accumulator / dot result
    lhs = th * wo * cs * in_isz                # one per-tap matmul operand
    weights = (4 * cs * cout * in_isz + 2 * cout * 4) * weight_bufs
    # double-buffered band/halo/output (BlockSpec pipelining) + in-kernel temps
    # (shifted-row band copy, one lhs slice, acc + one dot result).
    return 2 * band + 2 * halo + 2 * outb + band + lhs + 2 * accs + weights


def _default_vmem_budget():
    # Conservative per-step budget with headroom on all generations
    # (v5e scoped default 16 MiB, v6e 32 MiB, v7x 32 MiB of 64 MiB physical).
    budget = 20 << 20
    try:
        info = pltpu.get_tpu_info()
        phys = int(getattr(info, "vmem_capacity_bytes"))
        budget = min(max(phys // 4, 12 << 20), 28 << 20)
    except Exception:
        pass
    return budget


def _pick_tile_rows(h_out, w_pad, cs, cout, in_isz, out_isz, batch,
                    weight_bufs, budget_bytes):
    fitting = [d for d in range(1, h_out + 1)
               if h_out % d == 0
               and _vmem_footprint(d, w_pad, cs, cout, in_isz, out_isz,
                                   weight_bufs) <= budget_bytes]
    if not fitting:
        return 1
    # v7x megacore: prefer a grid whose total step count splits evenly over the
    # 2 TensorCores.
    even = [d for d in fitting if (batch * (h_out // d)) % 2 == 0]
    return max(even) if even else max(fitting)


# --------------------------------------------------------------------------- #
# Wrapper
# --------------------------------------------------------------------------- #
def downsample_forward(x, conv_w, conv_b, bn_gamma, bn_beta, bn_mean, bn_var, *,
                       eps=1e-5, tile_rows=None, use_bf16=False,
                       in_layout="NCHW", out_layout="NCHW", out_dtype=None,
                       vmem_budget_bytes=None):
    """Conv2d(in,out,3,stride=2,pad=1) + BatchNorm2d(eval) + ReLU.

    Defaults (NCHW in / NCHW out, f32) match the PyTorch module.  For best
    TPU throughput keep the consumer channels-last (in_layout/out_layout
    "NHWC", no relayout passes) and set use_bf16=True on v6e/v7x.
    """
    assert in_layout in ("NCHW", "NHWC") and out_layout in ("NCHW", "NHWC")
    if in_layout == "NCHW":
        B, Cin, H, W = x.shape
    else:
        B, H, W, Cin = x.shape
    Cout = conv_w.shape[0]
    assert conv_w.shape == (Cout, Cin, 3, 3), conv_w.shape
    assert H % 2 == 0 and W % 2 == 0, "even spatial dims only (see TODO above)"
    Ho, Wo = H // 2, W // 2
    Hp, Wp = Ho + 1, Wo + 1
    Cs = 4 * Cin

    compute_dtype = jnp.bfloat16 if use_bf16 else x.dtype
    out_dtype = x.dtype if out_dtype is None else out_dtype

    # ---- BN (inference) folded into an f32 scale/bias for the kernel epilogue.
    scale = (bn_gamma / jnp.sqrt(bn_var + eps)).astype(jnp.float32)
    bias = ((conv_b - bn_mean) * scale + bn_beta).astype(jnp.float32)

    # ---- im2col-pack the RAW conv weight for the 4 per-tap matmuls.
    # K index within tap k=(dh*2+dw):  (p*2+q)*Cin + c ;  kernel tap
    # (kh, kw) = (2*dh+p-1, 2*dw+q-1); invalid combinations get zero weight.
    wt = jnp.transpose(conv_w, (1, 2, 3, 0))                  # (Cin, 3, 3, Cout)
    w_packed = jnp.zeros((4 * Cs, Cout), conv_w.dtype)
    for dh in (0, 1):
        for dw in (0, 1):
            for p in (0, 1):
                for q in (0, 1):
                    kh, kw = 2 * dh + p - 1, 2 * dw + q - 1
                    if 0 <= kh <= 2 and 0 <= kw <= 2:
                        r0 = ((dh * 2 + dw) * 4 + (p * 2 + q)) * Cin
                        w_packed = w_packed.at[r0:r0 + Cin].set(wt[:, kh, kw, :])
    w_packed = w_packed.astype(compute_dtype)
    scale2 = scale.reshape(1, Cout)
    bias2 = bias.reshape(1, Cout)

    # ---- space-to-depth + top/left zero pad (single XLA pass; channels-last
    # input makes it a minor-dim shuffle instead of a full NCHW->NHWC relayout).
    xc = x.astype(compute_dtype)
    if in_layout == "NCHW":
        y = xc.reshape(B, Cin, Ho, 2, Wo, 2)
        y = jnp.transpose(y, (0, 2, 4, 3, 5, 1))
    else:
        y = xc.reshape(B, Ho, 2, Wo, 2, Cin)
        y = jnp.transpose(y, (0, 1, 3, 2, 4, 5))
    y = y.reshape(B, Ho, Wo, Cs)
    y = jnp.pad(y, ((0, 0), (1, 0), (1, 0), (0, 0)))          # (B, Hp, Wp, Cs)

    # ---- tile selection under an honest, generation-aware VMEM budget.
    weight_bufs = 1 if _buffered_const_supported() else 2
    in_isz = jnp.dtype(compute_dtype).itemsize
    out_isz = jnp.dtype(out_dtype).itemsize
    budget = _default_vmem_budget() if vmem_budget_bytes is None else vmem_budget_bytes
    if tile_rows is None:
        tile_rows = _pick_tile_rows(Ho, Wp, Cs, Cout, in_isz, out_isz, B,
                                    weight_bufs, budget)
    if Ho % tile_rows != 0:
        raise ValueError(f"tile_rows={tile_rows} must divide H_out={Ho}")
    TH = tile_rows
    n_t = Ho // TH
    foot = _vmem_footprint(TH, Wp, Cs, Cout, in_isz, out_isz, weight_bufs)
    vmem_limit = int(min(max(foot + (8 << 20), 16 << 20), 48 << 20))

    out = pl.pallas_call(
        _conv3x3_s2_bn_relu_kernel,
        out_shape=jax.ShapeDtypeStruct((B, Ho, Wo, Cout), out_dtype),
        grid_spec=pltpu.PrefetchScalarGridSpec(
            num_scalar_prefetch=0,
            grid=(B, n_t),
            in_specs=[
                # main row band of the tile
                pl.BlockSpec((1, TH, Wp, Cs), lambda b, t: (b, t, 0, 0)),
                # one-row halo just below the band (1-row blocks; valid because
                # the top pad makes Hp = Ho + 1, so row index (t+1)*TH <= Ho)
                pl.BlockSpec((1, 1, Wp, Cs), lambda b, t: (b, (t + 1) * TH, 0, 0)),
                # grid-invariant operands: packed weight, BN scale, BN bias
                _const_spec((4 * Cs, Cout)),
                _const_spec((1, Cout)),
                _const_spec((1, Cout)),
            ],
            out_specs=pl.BlockSpec((1, TH, Wo, Cout), lambda b, t: (b, t, 0, 0)),
        ),
        compiler_params=pltpu.CompilerParams(
            dimension_semantics=("parallel", "parallel"),
            vmem_limit_bytes=vmem_limit),
    )(y, y, w_packed, scale2, bias2)

    if out_layout == "NHWC":
        return out                                            # no post-transpose
    # NCHW parity path: one extra HBM pass (see TODO about in-kernel NCHW store).
    return jnp.transpose(out, (0, 3, 1, 2))


# --------------------------------------------------------------------------- #
# Pure-JAX reference
# --------------------------------------------------------------------------- #
def ref_downsample(x, conv_w, conv_b, gamma, beta, mean, var, eps=1e-5):
    """Conv2d(3, s=2, p=1) + eval-mode BatchNorm2d + ReLU (NCHW)."""
    y = lax.conv_general_dilated(
        x, conv_w, window_strides=(2, 2), padding=((1, 1), (1, 1)),
        dimension_numbers=("NCHW", "OIHW", "NCHW"),
        precision=lax.Precision.HIGHEST)
    y = y + conv_b[None, :, None, None]
    y = (y - mean[None, :, None, None]) / jnp.sqrt(var[None, :, None, None] + eps)
    y = gamma[None, :, None, None] * y + beta[None, :, None, None]
    return jnp.maximum(y, 0.0)


if __name__ == "__main__":
    key = jax.random.PRNGKey(0)
    kx, kw_, kb, kg, kbe, km, kv = jax.random.split(key, 7)

    B, Cin, Cout, H, W = 2, 4, 8, 16, 16
    x = jax.random.normal(kx, (B, Cin, H, W), jnp.float32)
    conv_w = jax.random.normal(kw_, (Cout, Cin, 3, 3), jnp.float32) / jnp.sqrt(Cin * 9.0)
    conv_b = 0.1 * jax.random.normal(kb, (Cout,), jnp.float32)
    gamma = 1.0 + 0.2 * jax.random.normal(kg, (Cout,), jnp.float32)
    beta = 0.1 * jax.random.normal(kbe, (Cout,), jnp.float32)
    mean = 0.1 * jax.random.normal(km, (Cout,), jnp.float32)
    var = jax.random.uniform(kv, (Cout,), jnp.float32, minval=0.5, maxval=1.5)

    # Probe once, eagerly, outside any jit trace.
    _buffered_const_supported()

    y_ref = ref_downsample(x, conv_w, conv_b, gamma, beta, mean, var)

    # 1) Module-parity path: NCHW in / NCHW out, f32, auto tile_rows.
    fwd = jax.jit(lambda *a: downsample_forward(*a))
    y1 = jax.block_until_ready(fwd(x, conv_w, conv_b, gamma, beta, mean, var))
    assert y1.shape == (B, Cout, H // 2, W // 2), y1.shape
    err1 = float(jnp.max(jnp.abs(y1 - y_ref)))
    assert jnp.allclose(y1, y_ref, atol=1e-2, rtol=1e-2), err1

    # 2) Multi-tile (exercises the halo spec) + NHWC output (no post-transpose).
    fwd_nhwc = jax.jit(lambda *a: downsample_forward(*a, tile_rows=4,
                                                     out_layout="NHWC"))
    y2 = jax.block_until_ready(fwd_nhwc(x, conv_w, conv_b, gamma, beta, mean, var))
    assert y2.shape == (B, H // 2, W // 2, Cout), y2.shape
    err2 = float(jnp.max(jnp.abs(jnp.transpose(y2, (0, 3, 1, 2)) - y_ref)))
    assert jnp.allclose(jnp.transpose(y2, (0, 3, 1, 2)), y_ref,
                        atol=1e-2, rtol=1e-2), err2

    # 3) Fast path: NHWC in / NHWC out, bf16 compute (recommended on v6e/v7x).
    x_nhwc = jnp.transpose(x, (0, 2, 3, 1))
    fwd_fast = jax.jit(lambda *a: downsample_forward(
        *a, in_layout="NHWC", out_layout="NHWC", use_bf16=True))
    y3 = jax.block_until_ready(
        fwd_fast(x_nhwc, conv_w, conv_b, gamma, beta, mean, var))
    y3_nchw = jnp.transpose(y3, (0, 3, 1, 2)).astype(jnp.float32)
    err3 = float(jnp.max(jnp.abs(y3_nchw - y_ref)))
    assert jnp.allclose(y3_nchw, y_ref, atol=1e-1, rtol=1e-1), err3

    print("KERNEL_OK")
</pallas_src>

<mosaic_0001>
module attributes {stable_mosaic.version = 11 : i64} {
  func.func @_probe(%arg0: i32, %arg1: memref<8x128xf32, #tpu.memory_space<vmem>>, %arg2: memref<8x128xf32, #tpu.memory_space<vmem>>, %arg3: memref<8x128xf32, #tpu.memory_space<vmem>>) attributes {dimension_semantics = [#tpu.dimension_semantics<arbitrary>], iteration_bounds = array<i64: 2>, scalar_prefetch = 0 : i64, scratch_operands = 0 : i64, tpu.core_type = #tpu.core_type<tc>, window_params = [{pipeline_mode = #tpu.pipeline_mode<synchronous>, transform_indices = @transform_0, window_bounds = array<i64: 8, 128>}, {pipeline_mode = #tpu.pipeline_mode<synchronous>, transform_indices = @transform_1, window_bounds = array<i64: 8, 128>}, {pipeline_mode = #tpu.pipeline_mode<synchronous>, transform_indices = @transform_2, window_bounds = array<i64: 8, 128>}]} {
    %c0 = arith.constant 0 : index
    %c0_0 = arith.constant 0 : index
    %0 = vector.load %arg2[%c0, %c0_0] : memref<8x128xf32, #tpu.memory_space<vmem>>, vector<8x128xf32>
    %c0_1 = arith.constant 0 : index
    %c0_2 = arith.constant 0 : index
    %1 = vector.load %arg1[%c0_1, %c0_2] : memref<8x128xf32, #tpu.memory_space<vmem>>, vector<8x128xf32>
    %2 = arith.addf %0, %1 : vector<8x128xf32>
    %c0_3 = arith.constant 0 : index
    %c0_4 = arith.constant 0 : index
    %3 = vector.load %arg3[%c0_3, %c0_4] : memref<8x128xf32, #tpu.memory_space<vmem>>, vector<8x128xf32>
    tpu.vector_store %arg3[%c0_3, %c0_4], %2 {strides = array<i32>} : memref<8x128xf32, #tpu.memory_space<vmem>>, vector<8x128xf32>,
    return
  }
  func.func @transform_0(%arg0: i32) -> (i32, i32) {
    %c0_i32 = arith.constant 0 : i32
    %c0_i32_0 = arith.constant 0 : i32
    %c0_i32_1 = arith.constant 0 : i32
    return %c0_i32, %c0_i32_0 : i32, i32
  }
  func.func @transform_1(%arg0: i32) -> (i32, i32) {
    %c0_i32 = arith.constant 0 : i32
    %c0_i32_0 = arith.constant 0 : i32
    %c0_i32_1 = arith.constant 0 : i32
    return %c0_i32, %c0_i32_0 : i32, i32
  }
  func.func @transform_2(%arg0: i32) -> (i32, i32) {
    %c0_i32 = arith.constant 0 : i32
    %c0_i32_0 = arith.constant 0 : i32
    %c0_i32_1 = arith.constant 0 : i32
    return %c0_i32, %c0_i32_0 : i32, i32
  }
}

module attributes {stable_mosaic.version = 11 : i64} {
  func.func @_conv3x3_s2_bn_relu_kernel(%arg0: i32, %arg1: i32, %arg2: memref<1x8x9x16xf32, #tpu.memory_space<vmem>>, %arg3: memref<1x1x9x16xf32, #tpu.memory_space<vmem>>, %arg4: memref<64x8xf32, #tpu.memory_space<vmem>>, %arg5: memref<1x8xf32, #tpu.memory_space<vmem>>, %arg6: memref<1x8xf32, #tpu.memory_space<vmem>>, %arg7: memref<1x8x8x8xf32, #tpu.memory_space<vmem>>) attributes {dimension_semantics = [#tpu.dimension_semantics<parallel>, #tpu.dimension_semantics<parallel>], iteration_bounds = array<i64: 2, 1>, scalar_prefetch = 0 : i64, scratch_operands = 0 : i64, tpu.core_type = #tpu.core_type<tc>, window_params = [{transform_indices = @transform_0, window_bounds = array<i64: 1, 8, 9, 16>}, {transform_indices = @transform_1, window_bounds = array<i64: 1, 1, 9, 16>}, {pipeline_mode = #tpu.pipeline_mode<synchronous>, transform_indices = @transform_2, window_bounds = array<i64: 64, 8>}, {pipeline_mode = #tpu.pipeline_mode<synchronous>, transform_indices = @transform_3, window_bounds = array<i64: 1, 8>}, {pipeline_mode = #tpu.pipeline_mode<synchronous>, transform_indices = @transform_4, window_bounds = array<i64: 1, 8>}, {transform_indices = @transform_5, window_bounds = array<i64: 1, 8, 8, 8>}]} {
    %c0 = arith.constant 0 : index
    %c0_0 = arith.constant 0 : index
    %c0_1 = arith.constant 0 : index
    %c0_2 = arith.constant 0 : index
    %0 = vector.load %arg2[%c0, %c0_0, %c0_1, %c0_2] : memref<1x8x9x16xf32, #tpu.memory_space<vmem>>, vector<1x8x9x16xf32>
    %1 = vector.shape_cast %0 : vector<1x8x9x16xf32> to vector<8x9x16xf32>
    %c0_3 = arith.constant 0 : index
    %c0_4 = arith.constant 0 : index
    %c0_5 = arith.constant 0 : index
    %c0_6 = arith.constant 0 : index
    %2 = vector.load %arg3[%c0_3, %c0_4, %c0_5, %c0_6] : memref<1x1x9x16xf32, #tpu.memory_space<vmem>>, vector<1x1x9x16xf32>
    %3 = vector.shape_cast %2 : vector<1x1x9x16xf32> to vector<1x9x16xf32>
    %4 = vector.extract_strided_slice %1 {offsets = [1, 0, 0], sizes = [7, 9, 16], strides = [1, 1, 1]} : vector<8x9x16xf32> to vector<7x9x16xf32>
    %5 = tpu.concatenate %4, %3 in 0 : vector<7x9x16xf32>, vector<1x9x16xf32> -> vector<8x9x16xf32>
    %6 = vector.extract_strided_slice %1 {offsets = [0, 0, 0], sizes = [8, 8, 16], strides = [1, 1, 1]} : vector<8x9x16xf32> to vector<8x8x16xf32>
    %7 = vector.shape_cast %6 : vector<8x8x16xf32> to vector<64x16xf32>
    %c0_7 = arith.constant 0 : index
    %c0_8 = arith.constant 0 : index
    %8 = vector.load %arg4[%c0_7, %c0_8] : memref<64x8xf32, #tpu.memory_space<vmem>>, vector<16x8xf32>
    %cst = arith.constant dense<0.000000e+00> : vector<64x8xf32>
    %9 = tpu.matmul %7, %8, %cst {dimension_numbers = #tpu.dot_dimension_numbers<[1], [0], [0], [1], [0, 0, 1, 1], [], []>} : vector<64x16xf32>, vector<16x8xf32>, vector<64x8xf32> -> vector<64x8xf32>
    %10 = vector.extract_strided_slice %1 {offsets = [0, 1, 0], sizes = [8, 8, 16], strides = [1, 1, 1]} : vector<8x9x16xf32> to vector<8x8x16xf32>
    %11 = vector.shape_cast %10 : vector<8x8x16xf32> to vector<64x16xf32>
    %c16 = arith.constant 16 : index
    %c0_9 = arith.constant 0 : index
    %12 = vector.load %arg4[%c16, %c0_9] : memref<64x8xf32, #tpu.memory_space<vmem>>, vector<16x8xf32>
    %cst_10 = arith.constant dense<0.000000e+00> : vector<64x8xf32>
    %13 = tpu.matmul %11, %12, %cst_10 {dimension_numbers = #tpu.dot_dimension_numbers<[1], [0], [0], [1], [0, 0, 1, 1], [], []>} : vector<64x16xf32>, vector<16x8xf32>, vector<64x8xf32> -> vector<64x8xf32>
    %14 = arith.addf %9, %13 : vector<64x8xf32>
    %15 = vector.extract_strided_slice %5 {offsets = [0, 0, 0], sizes = [8, 8, 16], strides = [1, 1, 1]} : vector<8x9x16xf32> to vector<8x8x16xf32>
    %16 = vector.shape_cast %15 : vector<8x8x16xf32> to vector<64x16xf32>
    %c32 = arith.constant 32 : index
    %c0_11 = arith.constant 0 : index
    %17 = vector.load %arg4[%c32, %c0_11] : memref<64x8xf32, #tpu.memory_space<vmem>>, vector<16x8xf32>
    %cst_12 = arith.constant dense<0.000000e+00> : vector<64x8xf32>
    %18 = tpu.matmul %16, %17, %cst_12 {dimension_numbers = #tpu.dot_dimension_numbers<[1], [0], [0], [1], [0, 0, 1, 1], [], []>} : vector<64x16xf32>, vector<16x8xf32>, vector<64x8xf32> -> vector<64x8xf32>
    %19 = arith.addf %14, %18 : vector<64x8xf32>
    %20 = vector.extract_strided_slice %5 {offsets = [0, 1, 0], sizes = [8, 8, 16], strides = [1, 1, 1]} : vector<8x9x16xf32> to vector<8x8x16xf32>
    %21 = vector.shape_cast %20 : vector<8x8x16xf32> to vector<64x16xf32>
    %c48 = arith.constant 48 : index
    %c0_13 = arith.constant 0 : index
    %22 = vector.load %arg4[%c48, %c0_13] : memref<64x8xf32, #tpu.memory_space<vmem>>, vector<16x8xf32>
    %cst_14 = arith.constant dense<0.000000e+00> : vector<64x8xf32>
    %23 = tpu.matmul %21, %22, %cst_14 {dimension_numbers = #tpu.dot_dimension_numbers<[1], [0], [0], [1], [0, 0, 1, 1], [], []>} : vector<64x16xf32>, vector<16x8xf32>, vector<64x8xf32> -> vector<64x8xf32>
    %24 = arith.addf %19, %23 : vector<64x8xf32>
    %c0_15 = arith.constant 0 : index
    %c0_16 = arith.constant 0 : index
    %25 = vector.load %arg5[%c0_15, %c0_16] : memref<1x8xf32, #tpu.memory_space<vmem>>, vector<1x8xf32>
    %26 = vector.broadcast %25 : vector<1x8xf32> to vector<64x8xf32>
    %27 = arith.mulf %24, %26 : vector<64x8xf32>
    %c0_17 = arith.constant 0 : index
    %c0_18 = arith.constant 0 : index
    %28 = vector.load %arg6[%c0_17, %c0_18] : memref<1x8xf32, #tpu.memory_space<vmem>>, vector<1x8xf32>
    %29 = vector.broadcast %28 : vector<1x8xf32> to vector<64x8xf32>
    %30 = arith.addf %27, %29 : vector<64x8xf32>
    %cst_19 = arith.constant 0.000000e+00 : f32
    %31 = vector.broadcast %cst_19 : f32 to vector<64x8xf32>
    %32 = arith.maximumf %30, %31 : vector<64x8xf32>
    %33 = vector.shape_cast %32 : vector<64x8xf32> to vector<8x8x8xf32>
    %c0_20 = arith.constant 0 : index
    %c0_21 = arith.constant 0 : index
    %c0_22 = arith.constant 0 : index
    %c0_23 = arith.constant 0 : index
    %34 = vector.load %arg7[%c0_20, %c0_21, %c0_22, %c0_23] : memref<1x8x8x8xf32, #tpu.memory_space<vmem>>, vector<1x8x8x8xf32>
    %35 = vector.shape_cast %34 : vector<1x8x8x8xf32> to vector<8x8x8xf32>
    %36 = vector.shape_cast %33 : vector<8x8x8xf32> to vector<1x8x8x8xf32>
    tpu.vector_store %arg7[%c0_20, %c0_21, %c0_22, %c0_23], %36 {strides = array<i32>} : memref<1x8x8x8xf32, #tpu.memory_space<vmem>>, vector<1x8x8x8xf32>,
    return
  }
  func.func @transform_0(%arg0: i32, %arg1: i32) -> (i32, i32, i32, i32) {
    %c0_i32 = arith.constant 0 : i32
    %c0_i32_0 = arith.constant 0 : i32
    %c0_i32_1 = arith.constant 0 : i32
    return %arg0, %arg1, %c0_i32, %c0_i32_0 : i32, i32, i32, i32
  }
  func.func @transform_1(%arg0: i32, %arg1: i32) -> (i32, i32, i32, i32) {
    %c1_i32 = arith.constant 1 : i32
    %0 = arith.addi %arg1, %c1_i32 : i32
    %c8_i32 = arith.constant 8 : i32
    %1 = arith.muli %0, %c8_i32 : i32
    %c0_i32 = arith.constant 0 : i32
    %c0_i32_0 = arith.constant 0 : i32
    %c0_i32_1 = arith.constant 0 : i32
    return %arg0, %1, %c0_i32, %c0_i32_0 : i32, i32, i32, i32
  }
  func.func @transform_2(%arg0: i32, %arg1: i32) -> (i32, i32) {
    %c0_i32 = arith.constant 0 : i32
    %c0_i32_0 = arith.constant 0 : i32
    %c0_i32_1 = arith.constant 0 : i32
    return %c0_i32, %c0_i32_0 : i32, i32
  }
  func.func @transform_3(%arg0: i32, %arg1: i32) -> (i32, i32) {
    %c0_i32 = arith.constant 0 : i32
    %c0_i32_0 = arith.constant 0 : i32
    %c0_i32_1 = arith.constant 0 : i32
    return %c0_i32, %c0_i32_0 : i32, i32
  }
  func.func @transform_4(%arg0: i32, %arg1: i32) -> (i32, i32) {
    %c0_i32 = arith.constant 0 : i32
    %c0_i32_0 = arith.constant 0 : i32
    %c0_i32_1 = arith.constant 0 : i32
    return %c0_i32, %c0_i32_0 : i32, i32
  }
  func.func @transform_5(%arg0: i32, %arg1: i32) -> (i32, i32, i32, i32) {
    %c0_i32 = arith.constant 0 : i32
    %c0_i32_0 = arith.constant 0 : i32
    %c0_i32_1 = arith.constant 0 : i32
    return %arg0, %arg1, %c0_i32, %c0_i32_0 : i32, i32, i32, i32
  }
}

</mosaic_0001>

<llo_original>
// kernel: tpu_custom_call.1
$region0: #{tpu_custom_call.1}
  #allocation0 [shape = 'u32[]', space=smem, size = 0x4, offset = 0x4, fixed_abs, tag = 'smem constant byte address 0x4 - core index']
  #allocation1 [shape = 'u32[144,128]{1,0:T(1,128)}', space=vmem, size = 0x12000, scoped, tag = 'internal scratch']
  %s0 = inlined_call_operand.hbm [shape: f32[8,128], index: 0, kind: input, shape index: {}]
  %s1 = inlined_call_operand.hbm [shape: f32[8,128], index: 1, kind: input, shape index: {}]
  %s2 = inlined_call_operand.hbm [shape: f32[8,128], index: 2, kind: output, shape index: {}]
  %s3 = sld [smem:[#allocation0]]
  $region49: #{tpu_custom_call.1} parent=0
    _
  %s5 = ssub.s32 1, %s3
  %s6 = scalar_select 0, %s5, %s3
  $region1: #{tpu_custom_call.1} parent=0
    #allocation2 [shape = 'u8[4096]{0}', space=vmem, size = 0x1000, scoped, tag = 'input window, operand 0, single buffered']
    #allocation3 [shape = 's32[2]{0}', space=sflag, size = 0x8, scoped, tag = 'scoped memory for tpu_custom_call.1']
    #allocation4 [shape = 's32[2]{0}', space=sflag, size = 0x8, scoped, tag = 'scoped memory for tpu_custom_call.1']
    #allocation5 [shape = 'u8[4096]{0}', space=vmem, size = 0x1000, scoped, tag = 'input window, operand 1, single buffered']
    #allocation6 [shape = 's32[1]{0}', space=sflag, size = 0x4, scoped, tag = 'scoped memory for tpu_custom_call.1']
    #allocation7 [shape = 'u8[4096]{0}', space=vmem, size = 0x1000, scoped, tag = 'output window, operand 0, single buffered']
    %7 = vsyncpa [#allocation3], 0
    %8 = vsyncpa [#allocation6], 0
    %9 = vsyncpa [#allocation4], 0
    loop: start=0, step=1, limit=4
    $region2: #{tpu_custom_call.1} parent=1 // loop_pre_header
      _
    $region3: #{tpu_custom_call.1} parent=1 // loop_header
      %s11 = sphi 0, %s15
      %p12 = scmp.ge.s32.totalorder %s11, 4
      %s19 = sphi 0, %s19
      %s21 = sphi 0, %s19
      %s22 = sphi 0, %s21
      %s36 = sphi 0, %s22
      %s40 = sphi 0, %s40
      %s42 = sphi 0, %s40
      %s43 = sphi 0, %s42
      %s57 = sphi 0, %s43
      %s61 = sphi 0, %s61
      %s63 = sphi 0, %s61
      %s64 = sphi 0, %s63
      %s78 = sphi 0, %s64
    $region4: #{tpu_custom_call.1} parent=1 // loop_header_branch
      %14 = sbr.rel (%p12) target = $region8
    $region5: #{tpu_custom_call.1} parent=1 // loop_body
      %s16 = ssub.s32 %s11, 1
      %s17 = ssub.s32 %s11, 2
      %s18 = sadd.s32 %s11, 1
      %s20 = sadd.s32 %s19, 1
      %p23 = scmp.eq.s32.totalorder %s11, 1
      %p24 = scmp.ne.s32.totalorder %s19, %s21
      %p25 = scmp.eq.s32.totalorder %s11, 0
      %p26 = por %p24, %p25
      %p27 = scmp.ne.s32.totalorder %s19, %s21
      %p28 = scmp.eq.s32.totalorder %s16, 1
      %p29 = por %p27, %p28
      %p30 = scmp.ne.s32.totalorder %s21, %s22
      %p31 = scmp.eq.s32.totalorder %s16, 0
      %p32 = por %p30, %p31
      %p33 = scmp.ne.s32.totalorder %s21, %s22
      %p34 = scmp.eq.s32.totalorder %s17, 1
      %p35 = por %p33, %p34
      %p37 = scmp.ne.s32.totalorder %s22, %s36
      %p38 = scmp.eq.s32.totalorder %s17, 0
      %p39 = por %p37, %p38
      %s41 = sadd.s32 %s40, 1
      %p44 = scmp.eq.s32.totalorder %s11, 1
      %p45 = scmp.ne.s32.totalorder %s40, %s42
      %p46 = scmp.eq.s32.totalorder %s11, 0
      %p47 = por %p45, %p46
      %p48 = scmp.ne.s32.totalorder %s40, %s42
      %p49 = scmp.eq.s32.totalorder %s16, 1
      %p50 = por %p48, %p49
      %p51 = scmp.ne.s32.totalorder %s42, %s43
      %p52 = scmp.eq.s32.totalorder %s16, 0
      %p53 = por %p51, %p52
      %p54 = scmp.ne.s32.totalorder %s42, %s43
      %p55 = scmp.eq.s32.totalorder %s17, 1
      %p56 = por %p54, %p55
      %p58 = scmp.ne.s32.totalorder %s43, %s57
      %p59 = scmp.eq.s32.totalorder %s17, 0
      %p60 = por %p58, %p59
      %s62 = sadd.s32 %s61, 1
      %p65 = scmp.eq.s32.totalorder %s11, 1
      %p66 = scmp.ne.s32.totalorder %s61, %s63
      %p67 = scmp.eq.s32.totalorder %s11, 0
      %p68 = por %p66, %p67
      %p69 = scmp.ne.s32.totalorder %s61, %s63
      %p70 = scmp.eq.s32.totalorder %s16, 1
      %p71 = por %p69, %p70
      %p72 = scmp.ne.s32.totalorder %s63, %s64
      %p73 = scmp.eq.s32.totalorder %s16, 0
      %p74 = por %p72, %p73
      %p75 = scmp.ne.s32.totalorder %s63, %s64
      %p76 = scmp.eq.s32.totalorder %s17, 1
      %p77 = por %p75, %p76
      %p79 = scmp.ne.s32.totalorder %s64, %s78
      %p80 = scmp.eq.s32.totalorder %s17, 0
      %p81 = por %p79, %p80
      %p82 = scmp.le.s32.totalorder 1, %s11
      %p83 = scmp.lt.s32.totalorder %s11, 3
      %p84 = pnand %p82, %p83
      %p85 = pneg %p84
      // Predicated region
      $region9: #{tpu_custom_call.1} parent=5 // pred_check
        _
      $region10: #{tpu_custom_call.1} parent=5 // pred_check_branch
        %87 = sbr.rel (%p84) target = $region12
      $region11: #{tpu_custom_call.1} parent=5 // pred_region
        %s88 = ssub.s32 %s11, 1
        // Predicated region
        $region13: #{tpu_custom_call.1} parent=11 // pred_check
          %p89 = pneg %p32
        $region14: #{tpu_custom_call.1} parent=11 // pred_check_branch
          %91 = sbr.rel (%p89) target = $region16
        $region15: #{tpu_custom_call.1} parent=11 // pred_region
          %s93 = ssub.s32 128, 128
          %94 = vsyncadd [#allocation3], %s93
          %s96 = sshll.u32 [#allocation2], 4
          %s97 = int_to_ptr.vmem [resolvable:$true] %s96
          %99 = dma.hbm_to_vmem [thread:$0]  %s0, 128, %s97, [#allocation3]
        $region16: #{tpu_custom_call.1} parent=11 // pred_fallthru
          _
        // Predicated region
        $region17: #{tpu_custom_call.1} parent=11 // pred_check
          %p100 = pneg %p53
        $region18: #{tpu_custom_call.1} parent=11 // pred_check_branch
          %102 = sbr.rel (%p100) target = $region20
        $region19: #{tpu_custom_call.1} parent=11 // pred_region
          %s104 = ssub.s32 128, 128
          %105 = vsyncadd [#allocation6], %s104
          %s107 = sshll.u32 [#allocation5], 4
          %s108 = int_to_ptr.vmem [resolvable:$true] %s107
          %110 = dma.hbm_to_vmem [thread:$0]  %s1, 128, %s108, [#allocation6]
        $region20: #{tpu_custom_call.1} parent=11 // pred_fallthru
          _
      $region12: #{tpu_custom_call.1} parent=5 // pred_fallthru
        _
      %p111 = scmp.lt.s32.totalorder %s11, 2
      // Predicated region
      $region21: #{tpu_custom_call.1} parent=5 // pred_check
        %p112 = pneg %p111
      $region22: #{tpu_custom_call.1} parent=5 // pred_check_branch
        %114 = sbr.rel (%p112) target = $region24
      $region23: #{tpu_custom_call.1} parent=5 // pred_region
        _
      $region24: #{tpu_custom_call.1} parent=5 // pred_fallthru
        _
      %p115 = scmp.le.s32.totalorder 1, %s11
      %p116 = scmp.lt.s32.totalorder %s11, 3
      %p117 = pnand %p115, %p116
      %p118 = pneg %p117
      // Predicated region
      $region25: #{tpu_custom_call.1} parent=5 // pred_check
        _
      $region26: #{tpu_custom_call.1} parent=5 // pred_check_branch
        %120 = sbr.rel (%p117) target = $region28
      $region27: #{tpu_custom_call.1} parent=5 // pred_region
        %s121 = ssub.s32 %s11, 1
        // Predicated region
        $region29: #{tpu_custom_call.1} parent=27 // pred_check
          %p122 = pneg %p32
        $region30: #{tpu_custom_call.1} parent=27 // pred_check_branch
          %124 = sbr.rel (%p122) target = $region32
        $region31: #{tpu_custom_call.1} parent=27 // pred_region
          %125 = dma.done [#allocation3], 128
        $region32: #{tpu_custom_call.1} parent=27 // pred_fallthru
          _
        // Predicated region
        $region33: #{tpu_custom_call.1} parent=27 // pred_check
          %p126 = pneg %p53
        $region34: #{tpu_custom_call.1} parent=27 // pred_check_branch
          %128 = sbr.rel (%p126) target = $region36
        $region35: #{tpu_custom_call.1} parent=27 // pred_region
          %129 = dma.done [#allocation6], 128
        $region36: #{tpu_custom_call.1} parent=27 // pred_fallthru
          _
        %p130 = pneg %p32
        %p131 = pneg %p29
        %p132 = pneg %p53
        %p133 = pneg %p50
        %p134 = pneg %p74
        %p135 = pneg %p71
        %v136 = vld [vmem:[#allocation5] sm:$0xff]
        %v137 = vld [vmem:[#allocation2] sm:$0xff]
        %v138 = vadd.f32 %v136, %v137
        %139 = vst [vmem:[#allocation7] sm:$0xff] %v138
        // Predicated region
        $region37: #{tpu_custom_call.1} parent=27 // pred_check
          %p140 = pneg %p71
        $region38: #{tpu_custom_call.1} parent=27 // pred_check_branch
          %142 = sbr.rel (%p140) target = $region40
        $region39: #{tpu_custom_call.1} parent=27 // pred_region
          %s144 = ssub.s32 128, 128
          %145 = vsyncadd [#allocation4], %s144
          %s147 = sshll.u32 [#allocation7], 4
          %s148 = int_to_ptr.vmem [resolvable:$true] %s147
          %150 = dma.vmem_to_hbm [thread:$0]  %s148, 128, %s2, [#allocation4]
        $region40: #{tpu_custom_call.1} parent=27 // pred_fallthru
          _
        // Predicated region
        $region41: #{tpu_custom_call.1} parent=27 // pred_check
          %p151 = pneg %p71
        $region42: #{tpu_custom_call.1} parent=27 // pred_check_branch
          %153 = sbr.rel (%p151) target = $region44
        $region43: #{tpu_custom_call.1} parent=27 // pred_region
          %154 = dma.done [#allocation4], 128
        $region44: #{tpu_custom_call.1} parent=27 // pred_fallthru
          _
      $region28: #{tpu_custom_call.1} parent=5 // pred_fallthru
        _
      %p155 = scmp.le.s32.totalorder 2, %s11
      // Predicated region
      $region45: #{tpu_custom_call.1} parent=5 // pred_check
        %p156 = pneg %p155
      $region46: #{tpu_custom_call.1} parent=5 // pred_check_branch
        %158 = sbr.rel (%p156) target = $region48
      $region47: #{tpu_custom_call.1} parent=5 // pred_region
        %s159 = ssub.s32 %s11, 2
      $region48: #{tpu_custom_call.1} parent=5 // pred_fallthru
        _
    $region6: #{tpu_custom_call.1} parent=1 // loop_footer
      %s15 = sadd.s32 1, %s11
    $region7: #{tpu_custom_call.1} parent=1 // loop_footer_branch
      %10 = sbr.rel target = $region3
    $region8: #{tpu_custom_call.1} parent=1 // loop_exit
      _
    %160 = vsyncpa [#allocation3], 1
    %s161 = scalar_lea.sflag [#allocation3], 1
    %162 = vsyncpa %s161, 1
    %163 = vsyncpa [#allocation6], 1
    %164 = vsyncpa [#allocation4], 1
    %s165 = scalar_lea.sflag [#allocation4], 1
    %166 = vsyncpa %s165, 1

// kernel: _lambda_.1
$region0: #{_lambda_.1}
  #allocation0 [shape = 'u32[]', space=smem, size = 0x4, offset = 0x4, fixed_abs, tag = 'smem constant byte address 0x4 - core index']
  #allocation1 [shape = 'u32[144,128]{1,0:T(1,128)}', space=vmem, size = 0x12000, scoped, tag = 'internal scratch']
  %s0 = inlined_call_operand.vmem [shape: f32[2,9,9,16], index: 0, kind: input, shape index: {}, may-alias: {0,1}]
  %s1 = inlined_call_operand.vmem [shape: f32[2,9,9,16], index: 1, kind: input, shape index: {}, may-alias: {0,1}]
  %s2 = inlined_call_operand.vmem [shape: f32[64,8], index: 2, kind: input, shape index: {}]
  %s3 = inlined_call_operand.vmem [shape: f32[1,8], index: 3, kind: input, shape index: {}]
  %s4 = inlined_call_operand.vmem [shape: f32[1,8], index: 4, kind: input, shape index: {}]
  %s5 = inlined_call_operand.vmem [shape: f32[2,8,8,8], index: 5, kind: output, shape index: {}]
  %s6 = sld [smem:[#allocation0]]
  $region53: #{_lambda_.1} parent=0
    _
  %s8 = ssub.s32 1, %s6
  %s9 = scalar_select 0, %s8, %s6
  loop: start=0, step=1, limit=4
  $region2: #{_lambda_.1} parent=0 // loop_pre_header
    _
  $region3: #{_lambda_.1} parent=0 // loop_header
    %s11 = sphi 0, %s15
    %p12 = scmp.ge.s32.totalorder %s11, 4
    %s18 = sphi 0, %s30
    %s19 = sphi 0, %s26
    %s20 = sphi 0, %s18
    %s21 = sphi 0, %s19
    %s22 = sphi 0, %s20
    %s23 = sphi 0, %s21
    %s35 = sphi 0, %s37
    %s38 = sphi 0, %s35
    %s39 = sphi 0, %s38
    %s55 = sphi 0, %s39
    %s67 = sphi 0, %s69
    %s70 = sphi 0, %s67
    %s71 = sphi 0, %s70
    %s87 = sphi 0, %s71
    %s91 = sphi 0, %s91
    %s93 = sphi 0, %s91
    %s94 = sphi 0, %s93
    %s108 = sphi 0, %s94
    %s112 = sphi 0, %s112
    %s114 = sphi 0, %s112
    %s115 = sphi 0, %s114
    %s129 = sphi 0, %s115
    %s133 = sphi 0, %s133
    %s135 = sphi 0, %s133
    %s136 = sphi 0, %s135
    %s150 = sphi 0, %s136
    %s158 = sphi 0, %s160
    %s161 = sphi 0, %s158
    %s162 = sphi 0, %s161
    %s178 = sphi 0, %s162
  $region4: #{_lambda_.1} parent=0 // loop_header_branch
    %14 = sbr.rel (%p12) target = $region8
  $region5: #{_lambda_.1} parent=0 // loop_body
    %s16 = ssub.s32 %s11, 1
    %s17 = ssub.s32 %s11, 2
    %s24 = sadd.s32 1, %s19
    %p25 = scmp.ge.s32.totalorder %s24, 1
    %s26 = scalar_select %p25, 0, %s24
    %s27 = sadd.s32 1, %s18
    %s28 = scalar_select %p25, %s27, %s18
    %p29 = scmp.ge.s32.totalorder %s28, 2
    %s30 = scalar_select %p29, 0, %s28
    %s31 = ssub.s32 %s18, %s30
    %s32 = ssub.s32 %s19, %s26
    %s33 = sor.u32 %s31, %s32
    %p34 = scmp.eq.s32.totalorder %s33, 0
    %s36 = sadd.s32 %s35, 1
    %s37 = scalar_select %p34, %s35, %s36
    %p40 = pneg %p34
    %p41 = scmp.eq.s32.totalorder %s11, 1
    %p42 = por %p40, %p41
    %p43 = scmp.ne.s32.totalorder %s35, %s38
    %p44 = scmp.eq.s32.totalorder %s11, 0
    %p45 = por %p43, %p44
    %p46 = scmp.ne.s32.totalorder %s35, %s38
    %p47 = scmp.eq.s32.totalorder %s16, 1
    %p48 = por %p46, %p47
    %p49 = scmp.ne.s32.totalorder %s38, %s39
    %p50 = scmp.eq.s32.totalorder %s16, 0
    %p51 = por %p49, %p50
    %p52 = scmp.ne.s32.totalorder %s38, %s39
    %p53 = scmp.eq.s32.totalorder %s17, 1
    %p54 = por %p52, %p53
    %p56 = scmp.ne.s32.totalorder %s39, %s55
    %p57 = scmp.eq.s32.totalorder %s17, 0
    %p58 = por %p56, %p57
    %s59 = sadd.s32 %s19, 1
    %s60 = smul.u32 %s59, 8
    %s61 = sadd.s32 %s26, 1
    %s62 = smul.u32 %s61, 8
    %s63 = ssub.s32 %s18, %s30
    %s64 = ssub.s32 %s60, %s62
    %s65 = sor.u32 %s63, %s64
    %p66 = scmp.eq.s32.totalorder %s65, 0
    %s68 = sadd.s32 %s67, 1
    %s69 = scalar_select %p66, %s67, %s68
    %p72 = pneg %p66
    %p73 = scmp.eq.s32.totalorder %s11, 1
    %p74 = por %p72, %p73
    %p75 = scmp.ne.s32.totalorder %s67, %s70
    %p76 = scmp.eq.s32.totalorder %s11, 0
    %p77 = por %p75, %p76
    %p78 = scmp.ne.s32.totalorder %s67, %s70
    %p79 = scmp.eq.s32.totalorder %s16, 1
    %p80 = por %p78, %p79
    %p81 = scmp.ne.s32.totalorder %s70, %s71
    %p82 = scmp.eq.s32.totalorder %s16, 0
    %p83 = por %p81, %p82
    %p84 = scmp.ne.s32.totalorder %s70, %s71
    %p85 = scmp.eq.s32.totalorder %s17, 1
    %p86 = por %p84, %p85
    %p88 = scmp.ne.s32.totalorder %s71, %s87
    %p89 = scmp.eq.s32.totalorder %s17, 0
    %p90 = por %p88, %p89
    %s92 = sadd.s32 %s91, 1
    %p95 = scmp.eq.s32.totalorder %s11, 1
    %p96 = scmp.ne.s32.totalorder %s91, %s93
    %p97 = scmp.eq.s32.totalorder %s11, 0
    %p98 = por %p96, %p97
    %p99 = scmp.ne.s32.totalorder %s91, %s93
    %p100 = scmp.eq.s32.totalorder %s16, 1
    %p101 = por %p99, %p100
    %p102 = scmp.ne.s32.totalorder %s93, %s94
    %p103 = scmp.eq.s32.totalorder %s16, 0
    %p104 = por %p102, %p103
    %p105 = scmp.ne.s32.totalorder %s93, %s94
    %p106 = scmp.eq.s32.totalorder %s17, 1
    %p107 = por %p105, %p106
    %p109 = scmp.ne.s32.totalorder %s94, %s108
    %p110 = scmp.eq.s32.totalorder %s17, 0
    %p111 = por %p109, %p110
    %s113 = sadd.s32 %s112, 1
    %p116 = scmp.eq.s32.totalorder %s11, 1
    %p117 = scmp.ne.s32.totalorder %s112, %s114
    %p118 = scmp.eq.s32.totalorder %s11, 0
    %p119 = por %p117, %p118
    %p120 = scmp.ne.s32.totalorder %s112, %s114
    %p121 = scmp.eq.s32.totalorder %s16, 1
    %p122 = por %p120, %p121
    %p123 = scmp.ne.s32.totalorder %s114, %s115
    %p124 = scmp.eq.s32.totalorder %s16, 0
    %p125 = por %p123, %p124
    %p126 = scmp.ne.s32.totalorder %s114, %s115
    %p127 = scmp.eq.s32.totalorder %s17, 1
    %p128 = por %p126, %p127
    %p130 = scmp.ne.s32.totalorder %s115, %s129
    %p131 = scmp.eq.s32.totalorder %s17, 0
    %p132 = por %p130, %p131
    %s134 = sadd.s32 %s133, 1
    %p137 = scmp.eq.s32.totalorder %s11, 1
    %p138 = scmp.ne.s32.totalorder %s133, %s135
    %p139 = scmp.eq.s32.totalorder %s11, 0
    %p140 = por %p138, %p139
    %p141 = scmp.ne.s32.totalorder %s133, %s135
    %p142 = scmp.eq.s32.totalorder %s16, 1
    %p143 = por %p141, %p142
    %p144 = scmp.ne.s32.totalorder %s135, %s136
    %p145 = scmp.eq.s32.totalorder %s16, 0
    %p146 = por %p144, %p145
    %p147 = scmp.ne.s32.totalorder %s135, %s136
    %p148 = scmp.eq.s32.totalorder %s17, 1
    %p149 = por %p147, %p148
    %p151 = scmp.ne.s32.totalorder %s136, %s150
    %p152 = scmp.eq.s32.totalorder %s17, 0
    %p153 = por %p151, %p152
    %s154 = ssub.s32 %s18, %s30
    %s155 = ssub.s32 %s19, %s26
    %s156 = sor.u32 %s154, %s155
    %p157 = scmp.eq.s32.totalorder %s156, 0
    %s159 = sadd.s32 %s158, 1
    %s160 = scalar_select %p157, %s158, %s159
    %p163 = pneg %p157
    %p164 = scmp.eq.s32.totalorder %s11, 1
    %p165 = por %p163, %p164
    %p166 = scmp.ne.s32.totalorder %s158, %s161
    %p167 = scmp.eq.s32.totalorder %s11, 0
    %p168 = por %p166, %p167
    %p169 = scmp.ne.s32.totalorder %s158, %s161
    %p170 = scmp.eq.s32.totalorder %s16, 1
    %p171 = por %p169, %p170
    %p172 = scmp.ne.s32.totalorder %s161, %s162
    %p173 = scmp.eq.s32.totalorder %s16, 0
    %p174 = por %p172, %p173
    %p175 = scmp.ne.s32.totalorder %s161, %s162
    %p176 = scmp.eq.s32.totalorder %s17, 1
    %p177 = por %p175, %p176
    %p179 = scmp.ne.s32.totalorder %s162, %s178
    %p180 = scmp.eq.s32.totalorder %s17, 0
    %p181 = por %p179, %p180
    %p182 = scmp.le.s32.totalorder 1, %s11
    %p183 = scmp.lt.s32.totalorder %s11, 3
    %p184 = pnand %p182, %p183
    %p185 = pneg %p184
    // Predicated region
    $region9: #{_lambda_.1} parent=5 // pred_check
      _
    $region10: #{_lambda_.1} parent=5 // pred_check_branch
      %187 = sbr.rel (%p184) target = $region12
    $region11: #{_lambda_.1} parent=5 // pred_region
      %s188 = ssub.s32 %s11, 1
      // Predicated region
      $region13: #{_lambda_.1} parent=11 // pred_check
        %p189 = pneg %p104
      $region14: #{_lambda_.1} parent=11 // pred_check_branch
        %191 = sbr.rel (%p189) target = $region16
      $region15: #{_lambda_.1} parent=11 // pred_region
        _
      $region16: #{_lambda_.1} parent=11 // pred_fallthru
        _
      // Predicated region
      $region17: #{_lambda_.1} parent=11 // pred_check
        %p192 = pneg %p125
      $region18: #{_lambda_.1} parent=11 // pred_check_branch
        %194 = sbr.rel (%p192) target = $region20
      $region19: #{_lambda_.1} parent=11 // pred_region
        _
      $region20: #{_lambda_.1} parent=11 // pred_fallthru
        _
      // Predicated region
      $region21: #{_lambda_.1} parent=11 // pred_check
        %p195 = pneg %p146
      $region22: #{_lambda_.1} parent=11 // pred_check_branch
        %197 = sbr.rel (%p195) target = $region24
      $region23: #{_lambda_.1} parent=11 // pred_region
        _
      $region24: #{_lambda_.1} parent=11 // pred_fallthru
        _
    $region12: #{_lambda_.1} parent=5 // pred_fallthru
      _
    %p198 = scmp.lt.s32.totalorder %s11, 2
    // Predicated region
    $region25: #{_lambda_.1} parent=5 // pred_check
      %p199 = pneg %p198
    $region26: #{_lambda_.1} parent=5 // pred_check_branch
      %201 = sbr.rel (%p199) target = $region28
    $region27: #{_lambda_.1} parent=5 // pred_region
      // Predicated region
      $region29: #{_lambda_.1} parent=27 // pred_check
        %p202 = pneg %p45
      $region30: #{_lambda_.1} parent=27 // pred_check_branch
        %204 = sbr.rel (%p202) target = $region32
      $region31: #{_lambda_.1} parent=27 // pred_region
        %s205 = smul.u32 8, %s19
        %s206 = ssub.s32 9, %s205
        %p207 = scmp.lt.s32.totalorder %s206, 8
        %s208 = scalar_select %p207, %s206, 8
        %s209 = smul.u32 128, %s208
        %s210 = smul.u32 %s209, 2
        %p211 = scmp.lt.s32.totalorder %s18, 1
        %s212 = scalar_select %p211, %s18, 1
        %p213 = scmp.lt.s32.totalorder %s205, 8
        %s214 = scalar_select %p213, %s205, 8
        %s215 = smul.addr %s214, 2
        %s216 = smul.addr %s212, 18
        %s217 = sadd.s32 %s215, %s216
        %s218 = smul.addr %s217, 8
        %s219 = scalar_lea.vmem %s0, %s218
        %s220 = smul.u32 8, %s19
        %s221 = ssub.s32 9, %s220
        %p222 = scmp.lt.s32.totalorder %s221, 8
        %s223 = scalar_select %p222, %s221, 8
        %s224 = smul.u32 128, %s223
        %s225 = smul.u32 %s224, 2
      $region32: #{_lambda_.1} parent=27 // pred_fallthru
        _
      // Predicated region
      $region33: #{_lambda_.1} parent=27 // pred_check
        %p226 = pneg %p77
      $region34: #{_lambda_.1} parent=27 // pred_check_branch
        %228 = sbr.rel (%p226) target = $region36
      $region35: #{_lambda_.1} parent=27 // pred_region
        %s229 = sadd.s32 %s19, 1
        %s230 = smul.u32 %s229, 8
        %p231 = scmp.lt.s32.totalorder %s18, 1
        %s232 = scalar_select %p231, %s18, 1
        %p233 = scmp.lt.s32.totalorder %s230, 8
        %s234 = scalar_select %p233, %s230, 8
        %s235 = smul.addr %s234, 2
        %s236 = smul.addr %s232, 18
        %s237 = sadd.s32 %s235, %s236
        %s238 = smul.addr %s237, 8
        %s239 = scalar_lea.vmem %s1, %s238
        %s240 = sadd.s32 %s19, 1
        %s241 = smul.u32 %s240, 8
      $region36: #{_lambda_.1} parent=27 // pred_fallthru
        _
    $region28: #{_lambda_.1} parent=5 // pred_fallthru
      _
    %p242 = scmp.le.s32.totalorder 1, %s11
    %p243 = scmp.lt.s32.totalorder %s11, 3
    %p244 = pnand %p242, %p243
    %p245 = pneg %p244
    // Predicated region
    $region37: #{_lambda_.1} parent=5 // pred_check
      _
    $region38: #{_lambda_.1} parent=5 // pred_check_branch
      %247 = sbr.rel (%p244) target = $region40
    $region39: #{_lambda_.1} parent=5 // pred_region
      %s248 = ssub.s32 %s11, 1
      %s249 = smul.u32 8, %s21
      %s250 = ssub.s32 9, %s249
      %p251 = scmp.lt.s32.totalorder %s250, 8
      %s252 = scalar_select %p251, %s250, 8
      %s253 = smul.u32 128, %s252
      %s254 = smul.u32 %s253, 2
      %p255 = scmp.lt.s32.totalorder %s20, 1
      %s256 = scalar_select %p255, %s20, 1
      %p257 = scmp.lt.s32.totalorder %s249, 8
      %s258 = scalar_select %p257, %s249, 8
      %s259 = smul.addr %s258, 2
      %s260 = smul.addr %s256, 18
      %s261 = sadd.s32 %s259, %s260
      %s262 = smul.addr %s261, 8
      %s263 = scalar_lea.vmem %s0, %s262
      %p264 = pneg %p51
      %p265 = pneg %p48
      %s266 = sadd.s32 %s21, 1
      %s267 = smul.u32 %s266, 8
      %p268 = scmp.lt.s32.totalorder %s20, 1
      %s269 = scalar_select %p268, %s20, 1
      %p270 = scmp.lt.s32.totalorder %s267, 8
      %s271 = scalar_select %p270, %s267, 8
      %s272 = smul.addr %s271, 2
      %s273 = smul.addr %s269, 18
      %s274 = sadd.s32 %s272, %s273
      %s275 = smul.addr %s274, 8
      %s276 = scalar_lea.vmem %s1, %s275
      %p277 = pneg %p83
      %p278 = pneg %p80
      %p279 = pneg %p104
      %p280 = pneg %p101
      %p281 = pneg %p125
      %p282 = pneg %p122
      %p283 = pneg %p146
      %p284 = pneg %p143
      %p285 = pneg %p174
      %p286 = pneg %p171
      %s287 = smul.u32 8, %s21
      %p288 = scmp.lt.s32.totalorder %s20, 1
      %s289 = scalar_select %p288, %s20, 1
      %p290 = scmp.lt.s32.totalorder %s287, 7
      %s291 = scalar_select %p290, %s287, 7
      %s292 = smul.addr %s289, 8
      %s293 = sadd.s32 %s291, %s292
      %s294 = smul.addr %s293, 8
      %s295 = scalar_lea.vmem %s5, %s294
      %s296 = smul.u32 8, %s21
      %s297 = ssub.s32 9, %s296
      %p298 = scmp.lt.s32.totalorder %s297, 8
      %s299 = scalar_select %p298, %s297, 8
      %s300 = smul.u32 128, %s299
      %s301 = smul.u32 %s300, 2
      %p302 = scmp.lt.s32.totalorder %s20, 1
      %s303 = scalar_select %p302, %s20, 1
      %p304 = scmp.lt.s32.totalorder %s296, 8
      %s305 = scalar_select %p304, %s296, 8
      %s306 = smul.addr %s305, 2
      %s307 = smul.addr %s303, 18
      %s308 = sadd.s32 %s306, %s307
      %s309 = smul.addr %s308, 8
      %s310 = scalar_lea.vmem %s0, %s309
      %s311 = smul.u32 8, %s21
      %s312 = ssub.s32 9, %s311
      %p313 = scmp.lt.s32.totalorder %s312, 8
      %s314 = scalar_select %p313, %s312, 8
      %s315 = smul.u32 128, %s314
      %s316 = smul.u32 %s315, 2
      %s317 = sadd.s32 %s21, 1
      %s318 = smul.u32 %s317, 8
      %p319 = scmp.lt.s32.totalorder %s20, 1
      %s320 = scalar_select %p319, %s20, 1
      %p321 = scmp.lt.s32.totalorder %s318, 8
      %s322 = scalar_select %p321, %s318, 8
      %s323 = smul.addr %s322, 2
      %s324 = smul.addr %s320, 18
      %s325 = sadd.s32 %s323, %s324
      %s326 = smul.addr %s325, 8
      %s327 = scalar_lea.vmem %s1, %s326
      %s328 = sadd.s32 %s21, 1
      %s329 = smul.u32 %s328, 8
      %s330 = smul.u32 8, %s21
      %p331 = scmp.lt.s32.totalorder %s20, 1
      %s332 = scalar_select %p331, %s20, 1
      %p333 = scmp.lt.s32.totalorder %s330, 7
      %s334 = scalar_select %p333, %s330, 7
      %s335 = smul.addr %s332, 8
      %s336 = sadd.s32 %s334, %s335
      %s337 = smul.addr %s336, 8
      %s338 = scalar_lea.vmem %s5, %s337
      %s339 = smul.u32 8, %s21
      %v340 = vld [vmem:[%s310] sm:$0xff]
      %v341 = vld [vmem:[%s310 + $0x8] sm:$0x1]
      %v342 = vld [vmem:[%s310 + $0x10] sm:$0xff]
      %v343 = vld [vmem:[%s310 + $0x18] sm:$0x1]
      %v344 = vld [vmem:[%s310 + $0x20] sm:$0xff]
      %v345 = vld [vmem:[%s310 + $0x28] sm:$0x1]
      %v346 = vld [vmem:[%s310 + $0x30] sm:$0xff]
      %v347 = vld [vmem:[%s310 + $0x38] sm:$0x1]
      %v348 = vld [vmem:[%s310 + $0x40] sm:$0xff]
      %v349 = vld [vmem:[%s310 + $0x48] sm:$0x1]
      %v350 = vld [vmem:[%s310 + $0x50] sm:$0xff]
      %v351 = vld [vmem:[%s310 + $0x58] sm:$0x1]
      %v352 = vld [vmem:[%s310 + $0x60] sm:$0xff]
      %v353 = vld [vmem:[%s310 + $0x68] sm:$0x1]
      %v354 = vld [vmem:[%s310 + $0x70] sm:$0xff]
      %v355 = vld [vmem:[%s310 + $0x78] sm:$0x1]
      %v356 = vld [vmem:[%s327] sm:$0xff]
      %v357 = vld [vmem:[%s327 + $0x8] sm:$0x1]
      %v358 = vld [vmem:[%s2] sm:$0xff]
      %v359 = vld [vmem:[%s2 + $0x8] sm:$0xff]
      %vm376 = vcmask 1046528
      %v377 = vrot.slane %v340, 1
      %v378 = vrot.slane %v341, 1
      %v379 = vsel %vm376, %v377, %v378
      %v380 = vrot.slane %v342, 1
      %v381 = vrot.slane %v343, 1
      %v382 = vsel %vm376, %v380, %v381
      %v383 = vrot.slane %v344, 1
      %v384 = vrot.slane %v345, 1
      %v385 = vsel %vm376, %v383, %v384
      %v386 = vrot.slane %v346, 1
      %v387 = vrot.slane %v347, 1
      %v388 = vsel %vm376, %v386, %v387
      %v389 = vrot.slane %v348, 1
      %v390 = vrot.slane %v349, 1
      %v391 = vsel %vm376, %v389, %v390
      %v392 = vrot.slane %v350, 1
      %v393 = vrot.slane %v351, 1
      %v394 = vsel %vm376, %v392, %v393
      %v395 = vrot.slane %v352, 1
      %v396 = vrot.slane %v353, 1
      %v397 = vsel %vm376, %v395, %v396
      %v398 = vrot.slane %v354, 1
      %v399 = vrot.slane %v355, 1
      %v400 = vsel %vm376, %v398, %v399
      %v401 = vld [vmem:[%s2 + $0x10] sm:$0xff]
      %v402 = vld [vmem:[%s2 + $0x18] sm:$0xff]
      %vm403 = vcmask 130048
      %v404 = vsel %vm403, %v379, 0
      %v406 = vsel %vm403, %v382, 0
      %v408 = vsel %vm403, %v385, 0
      %v410 = vsel %vm403, %v388, 0
      %v412 = vsel %vm403, %v391, 0
      %v414 = vsel %vm403, %v394, 0
      %v416 = vsel %vm403, %v397, 0
      %v418 = vsel %vm403, %v400, 0
      %420 = vmatprep.subr.mxu0 0.0
      %421 = vmatpush1.msra.mxu0 %v401
      %422 = vmatprep.subr.mxu0 0.0
      %423 = vmatpush1.msra.mxu0 %v402
      %424 = vmatprep.subr.mxu0 0.0
      %425 = vmatpush1.msra.mxu0 0.0
      %426 = vmatprep.subr.mxu0 0.0
      %427 = vmatpush1.msra.mxu0 0.0
      %428 = vmatprep.subr.mxu0 0.0
      %429 = vmatpush1.msra.mxu0 0.0
      %430 = vmatprep.subr.mxu0 0.0
      %431 = vmatpush1.msra.mxu0 0.0
      %432 = vmatprep.subr.mxu0 0.0
      %433 = vmatpush1.msra.mxu0 0.0
      %434 = vmatprep.subr.mxu0 0.0
      %435 = vmatpush1.msra.mxu0 0.0
      %436 = vmatprep.subr.mxu0 0.0
      %437 = vmatpush1.msra.mxu0 0.0
      %438 = vmatprep.subr.mxu0 0.0
      %439 = vmatpush1.msra.mxu0 0.0
      %440 = vmatprep.subr.mxu0 0.0
      %441 = vmatpush1.msra.mxu0 0.0
      %442 = vmatprep.subr.mxu0 0.0
      %443 = vmatpush1.msra.mxu0 0.0
      %444 = vmatprep.subr.mxu0 0.0
      %445 = vmatpush1.msra.mxu0 0.0
      %446 = vmatprep.subr.mxu0 0.0
      %447 = vmatpush1.msra.mxu0 0.0
      %448 = vmatprep.subr.mxu0 0.0
      %449 = vmatpush1.msra.mxu0 0.0
      %450 = vmatprep.subr.mxu0 0.0
      %451 = vmatpush1.msra.mxu0 0.0
      %452 = vmatprep.subr.mxu0 0.0
      %453 = vmatpush1.msra.mxu0 0.0
      %454 = vmatprep.subr.mxu0 0.0
      %455 = vmatpush1.msra.mxu0 0.0
      %456 = vmatprep.subr.mxu0 0.0
      %457 = vmatpush1.msra.mxu0 0.0
      %458 = vmatprep.subr.mxu0 0.0
      %459 = vmatpush1.msra.mxu0 0.0
      %460 = vmatprep.subr.mxu0 0.0
      %461 = vmatpush1.msra.mxu0 0.0
      %462 = vmatprep.subr.mxu0 0.0
      %463 = vmatpush1.msra.mxu0 0.0
      %464 = vmatprep.subr.mxu0 0.0
      %465 = vmatpush1.msra.mxu0 0.0
      %466 = vmatprep.subr.mxu0 0.0
      %467 = vmatpush1.msra.mxu0 0.0
      %468 = vmatprep.subr.mxu0 0.0
      %469 = vmatpush1.msra.mxu0 0.0
      %470 = vmatprep.subr.mxu0 0.0
      %471 = vmatpush1.msra.mxu0 0.0
      %472 = vmatprep.subr.mxu0 0.0
      %473 = vmatpush1.msra.mxu0 0.0
      %474 = vmatprep.subr.mxu0 0.0
      %475 = vmatpush1.msra.mxu0 0.0
      %476 = vmatprep.subr.mxu0 0.0
      %477 = vmatpush1.msra.mxu0 0.0
      %478 = vmatprep.subr.mxu0 0.0
      %479 = vmatpush1.msra.mxu0 0.0
      %480 = vmatprep.subr.mxu0 0.0
      %481 = vmatpush1.msra.mxu0 0.0
      %482 = vmatprep.subr.mxu0 0.0
      %483 = vmatpush1.msra.mxu0 0.0
      %484 = vmatprep.mubr.f32.mxu0 0.0
      %485 = vmatmul.mubr.f32.gmra.mrb[0].mxu0 %v404
      %v486 = vpop.f32.mrb[0].mxu0
      %v487 = vadd.f32 0.0, %v486
      %v488 = vpop.f32.mrb[0].mxu0
      %489 = vmatprep.mubr.f32.mxu0 0.0
      %490 = vmatmul.mubr.f32.gmra.mrb[0].mxu0 %v406
      %v491 = vpop.f32.mrb[0].mxu0
      %v492 = vadd.f32 0.0, %v491
      %v493 = vpop.f32.mrb[0].mxu0
      %494 = vmatprep.mubr.f32.mxu0 0.0
      %495 = vmatmul.mubr.f32.gmra.mrb[0].mxu0 %v408
      %v496 = vpop.f32.mrb[0].mxu0
      %v497 = vadd.f32 0.0, %v496
      %v498 = vpop.f32.mrb[0].mxu0
      %499 = vmatprep.mubr.f32.mxu0 0.0
      %500 = vmatmul.mubr.f32.gmra.mrb[0].mxu0 %v410
      %v501 = vpop.f32.mrb[0].mxu0
      %v502 = vadd.f32 0.0, %v501
      %v503 = vpop.f32.mrb[0].mxu0
      %504 = vmatprep.mubr.f32.mxu0 0.0
      %505 = vmatmul.mubr.f32.gmra.mrb[0].mxu0 %v412
      %v506 = vpop.f32.mrb[0].mxu0
      %v507 = vadd.f32 0.0, %v506
      %v508 = vpop.f32.mrb[0].mxu0
      %509 = vmatprep.mubr.f32.mxu0 0.0
      %510 = vmatmul.mubr.f32.gmra.mrb[0].mxu0 %v414
      %v511 = vpop.f32.mrb[0].mxu0
      %v512 = vadd.f32 0.0, %v511
      %v513 = vpop.f32.mrb[0].mxu0
      %514 = vmatprep.mubr.f32.mxu0 0.0
      %515 = vmatmul.mubr.f32.gmra.mrb[0].mxu0 %v416
      %v516 = vpop.f32.mrb[0].mxu0
      %v517 = vadd.f32 0.0, %v516
      %v518 = vpop.f32.mrb[0].mxu0
      %519 = vmatprep.mubr.f32.mxu0 0.0
      %520 = vmatmul.mubr.f32.gmra.mrb[0].mxu0 %v418
      %v521 = vpop.f32.mrb[0].mxu0
      %v522 = vadd.f32 0.0, %v521
      %v523 = vpop.f32.mrb[0].mxu0
      %524 = vdwg.mxu0
      %v525 = vsel %vm403, %v340, 0
      %v527 = vsel %vm403, %v342, 0
      %v529 = vsel %vm403, %v344, 0
      %v531 = vsel %vm403, %v346, 0
      %v533 = vsel %vm403, %v348, 0
      %v535 = vsel %vm403, %v350, 0
      %v537 = vsel %vm403, %v352, 0
      %v539 = vsel %vm403, %v354, 0
      %541 = vmatprep.subr.mxu0 0.0
      %542 = vmatpush1.msra.mxu0 %v358
      %543 = vmatprep.subr.mxu0 0.0
      %544 = vmatpush1.msra.mxu0 %v359
      %545 = vmatprep.subr.mxu0 0.0
      %546 = vmatpush1.msra.mxu0 0.0
      %547 = vmatprep.subr.mxu0 0.0
      %548 = vmatpush1.msra.mxu0 0.0
      %549 = vmatprep.subr.mxu0 0.0
      %550 = vmatpush1.msra.mxu0 0.0
      %551 = vmatprep.subr.mxu0 0.0
      %552 = vmatpush1.msra.mxu0 0.0
      %553 = vmatprep.subr.mxu0 0.0
      %554 = vmatpush1.msra.mxu0 0.0
      %555 = vmatprep.subr.mxu0 0.0
      %556 = vmatpush1.msra.mxu0 0.0
      %557 = vmatprep.subr.mxu0 0.0
      %558 = vmatpush1.msra.mxu0 0.0
      %559 = vmatprep.subr.mxu0 0.0
      %560 = vmatpush1.msra.mxu0 0.0
      %561 = vmatprep.subr.mxu0 0.0
      %562 = vmatpush1.msra.mxu0 0.0
      %563 = vmatprep.subr.mxu0 0.0
      %564 = vmatpush1.msra.mxu0 0.0
      %565 = vmatprep.subr.mxu0 0.0
      %566 = vmatpush1.msra.mxu0 0.0
      %567 = vmatprep.subr.mxu0 0.0
      %568 = vmatpush1.msra.mxu0 0.0
      %569 = vmatprep.subr.mxu0 0.0
      %570 = vmatpush1.msra.mxu0 0.0
      %571 = vmatprep.subr.mxu0 0.0
      %572 = vmatpush1.msra.mxu0 0.0
      %573 = vmatprep.subr.mxu0 0.0
      %574 = vmatpush1.msra.mxu0 0.0
      %575 = vmatprep.subr.mxu0 0.0
      %576 = vmatpush1.msra.mxu0 0.0
      %577 = vmatprep.subr.mxu0 0.0
      %578 = vmatpush1.msra.mxu0 0.0
      %579 = vmatprep.subr.mxu0 0.0
      %580 = vmatpush1.msra.mxu0 0.0
      %581 = vmatprep.subr.mxu0 0.0
      %582 = vmatpush1.msra.mxu0 0.0
      %583 = vmatprep.subr.mxu0 0.0
      %584 = vmatpush1.msra.mxu0 0.0
      %585 = vmatprep.subr.mxu0 0.0
      %586 = vmatpush1.msra.mxu0 0.0
      %587 = vmatprep.subr.mxu0 0.0
      %588 = vmatpush1.msra.mxu0 0.0
      %589 = vmatprep.subr.mxu0 0.0
      %590 = vmatpush1.msra.mxu0 0.0
      %591 = vmatprep.subr.mxu0 0.0
      %592 = vmatpush1.msra.mxu0 0.0
      %593 = vmatprep.subr.mxu0 0.0
      %594 = vmatpush1.msra.mxu0 0.0
      %595 = vmatprep.subr.mxu0 0.0
      %596 = vmatpush1.msra.mxu0 0.0
      %597 = vmatprep.subr.mxu0 0.0
      %598 = vmatpush1.msra.mxu0 0.0
      %599 = vmatprep.subr.mxu0 0.0
      %600 = vmatpush1.msra.mxu0 0.0
      %601 = vmatprep.subr.mxu0 0.0
      %602 = vmatpush1.msra.mxu0 0.0
      %603 = vmatprep.subr.mxu0 0.0
      %604 = vmatpush1.msra.mxu0 0.0
      %605 = vmatprep.mubr.f32.mxu0 0.0
      %606 = vmatmul.mubr.f32.gmra.mrb[0].mxu0 %v525
      %v607 = vpop.f32.mrb[0].mxu0
      %v608 = vadd.f32 %v487, %v607
      %v609 = vpop.f32.mrb[0].mxu0
      %610 = vmatprep.mubr.f32.mxu0 0.0
      %611 = vmatmul.mubr.f32.gmra.mrb[0].mxu0 %v527
      %v612 = vpop.f32.mrb[0].mxu0
      %v613 = vadd.f32 %v492, %v612
      %v614 = vpop.f32.mrb[0].mxu0
      %615 = vmatprep.mubr.f32.mxu0 0.0
      %616 = vmatmul.mubr.f32.gmra.mrb[0].mxu0 %v529
      %v617 = vpop.f32.mrb[0].mxu0
      %v618 = vadd.f32 %v497, %v617
      %v619 = vpop.f32.mrb[0].mxu0
      %620 = vmatprep.mubr.f32.mxu0 0.0
      %621 = vmatmul.mubr.f32.gmra.mrb[0].mxu0 %v531
      %v622 = vpop.f32.mrb[0].mxu0
      %v623 = vadd.f32 %v502, %v622
      %v624 = vpop.f32.mrb[0].mxu0
      %625 = vmatprep.mubr.f32.mxu0 0.0
      %626 = vmatmul.mubr.f32.gmra.mrb[0].mxu0 %v533
      %v627 = vpop.f32.mrb[0].mxu0
      %v628 = vadd.f32 %v507, %v627
      %v629 = vpop.f32.mrb[0].mxu0
      %630 = vmatprep.mubr.f32.mxu0 0.0
      %631 = vmatmul.mubr.f32.gmra.mrb[0].mxu0 %v535
      %v632 = vpop.f32.mrb[0].mxu0
      %v633 = vadd.f32 %v512, %v632
      %v634 = vpop.f32.mrb[0].mxu0
      %635 = vmatprep.mubr.f32.mxu0 0.0
      %636 = vmatmul.mubr.f32.gmra.mrb[0].mxu0 %v537
      %v637 = vpop.f32.mrb[0].mxu0
      %v638 = vadd.f32 %v517, %v637
      %v639 = vpop.f32.mrb[0].mxu0
      %640 = vmatprep.mubr.f32.mxu0 0.0
      %641 = vmatmul.mubr.f32.gmra.mrb[0].mxu0 %v539
      %v642 = vpop.f32.mrb[0].mxu0
      %v643 = vadd.f32 %v522, %v642
      %v644 = vpop.f32.mrb[0].mxu0
      %645 = vdwg.mxu0
      %v646 = vld [vmem:[%s2 + $0x20] sm:$0xff]
      %v647 = vld [vmem:[%s2 + $0x28] sm:$0xff]
      %v649 = vsel %vm403, %v356, 0
      %651 = vmatprep.subr.mxu0 0.0
      %652 = vmatpush1.msra.mxu0 %v646
      %653 = vmatprep.subr.mxu0 0.0
      %654 = vmatpush1.msra.mxu0 %v647
      %655 = vmatprep.subr.mxu0 0.0
      %656 = vmatpush1.msra.mxu0 0.0
      %657 = vmatprep.subr.mxu0 0.0
      %658 = vmatpush1.msra.mxu0 0.0
      %659 = vmatprep.subr.mxu0 0.0
      %660 = vmatpush1.msra.mxu0 0.0
      %661 = vmatprep.subr.mxu0 0.0
      %662 = vmatpush1.msra.mxu0 0.0
      %663 = vmatprep.subr.mxu0 0.0
      %664 = vmatpush1.msra.mxu0 0.0
      %665 = vmatprep.subr.mxu0 0.0
      %666 = vmatpush1.msra.mxu0 0.0
      %667 = vmatprep.subr.mxu0 0.0
      %668 = vmatpush1.msra.mxu0 0.0
      %669 = vmatprep.subr.mxu0 0.0
      %670 = vmatpush1.msra.mxu0 0.0
      %671 = vmatprep.subr.mxu0 0.0
      %672 = vmatpush1.msra.mxu0 0.0
      %673 = vmatprep.subr.mxu0 0.0
      %674 = vmatpush1.msra.mxu0 0.0
      %675 = vmatprep.subr.mxu0 0.0
      %676 = vmatpush1.msra.mxu0 0.0
      %677 = vmatprep.subr.mxu0 0.0
      %678 = vmatpush1.msra.mxu0 0.0
      %679 = vmatprep.subr.mxu0 0.0
      %680 = vmatpush1.msra.mxu0 0.0
      %681 = vmatprep.subr.mxu0 0.0
      %682 = vmatpush1.msra.mxu0 0.0
      %683 = vmatprep.subr.mxu0 0.0
      %684 = vmatpush1.msra.mxu0 0.0
      %685 = vmatprep.subr.mxu0 0.0
      %686 = vmatpush1.msra.mxu0 0.0
      %687 = vmatprep.subr.mxu0 0.0
      %688 = vmatpush1.msra.mxu0 0.0
      %689 = vmatprep.subr.mxu0 0.0
      %690 = vmatpush1.msra.mxu0 0.0
      %691 = vmatprep.subr.mxu0 0.0
      %692 = vmatpush1.msra.mxu0 0.0
      %693 = vmatprep.subr.mxu0 0.0
      %694 = vmatpush1.msra.mxu0 0.0
      %695 = vmatprep.subr.mxu0 0.0
      %696 = vmatpush1.msra.mxu0 0.0
      %697 = vmatprep.subr.mxu0 0.0
      %698 = vmatpush1.msra.mxu0 0.0
      %699 = vmatprep.subr.mxu0 0.0
      %700 = vmatpush1.msra.mxu0 0.0
      %701 = vmatprep.subr.mxu0 0.0
      %702 = vmatpush1.msra.mxu0 0.0
      %703 = vmatprep.subr.mxu0 0.0
      %704 = vmatpush1.msra.mxu0 0.0
      %705 = vmatprep.subr.mxu0 0.0
      %706 = vmatpush1.msra.mxu0 0.0
      %707 = vmatprep.subr.mxu0 0.0
      %708 = vmatpush1.msra.mxu0 0.0
      %709 = vmatprep.subr.mxu0 0.0
      %710 = vmatpush1.msra.mxu0 0.0
      %711 = vmatprep.subr.mxu0 0.0
      %712 = vmatpush1.msra.mxu0 0.0
      %713 = vmatprep.subr.mxu0 0.0
      %714 = vmatpush1.msra.mxu0 0.0
      %715 = vmatprep.mubr.f32.mxu0 0.0
      %716 = vmatmul.mubr.f32.gmra.mrb[0].mxu0 %v527
      %v717 = vpop.f32.mrb[0].mxu0
      %v718 = vadd.f32 0.0, %v717
      %v719 = vpop.f32.mrb[0].mxu0
      %720 = vmatprep.mubr.f32.mxu0 0.0
      %721 = vmatmul.mubr.f32.gmra.mrb[0].mxu0 %v529
      %v722 = vpop.f32.mrb[0].mxu0
      %v723 = vadd.f32 0.0, %v722
      %v724 = vpop.f32.mrb[0].mxu0
      %725 = vmatprep.mubr.f32.mxu0 0.0
      %726 = vmatmul.mubr.f32.gmra.mrb[0].mxu0 %v531
      %v727 = vpop.f32.mrb[0].mxu0
      %v728 = vadd.f32 0.0, %v727
      %v729 = vpop.f32.mrb[0].mxu0
      %730 = vmatprep.mubr.f32.mxu0 0.0
      %731 = vmatmul.mubr.f32.gmra.mrb[0].mxu0 %v533
      %v732 = vpop.f32.mrb[0].mxu0
      %v733 = vadd.f32 0.0, %v732
      %v734 = vpop.f32.mrb[0].mxu0
      %735 = vmatprep.mubr.f32.mxu0 0.0
      %736 = vmatmul.mubr.f32.gmra.mrb[0].mxu0 %v535
      %v737 = vpop.f32.mrb[0].mxu0
      %v738 = vadd.f32 0.0, %v737
      %v739 = vpop.f32.mrb[0].mxu0
      %740 = vmatprep.mubr.f32.mxu0 0.0
      %741 = vmatmul.mubr.f32.gmra.mrb[0].mxu0 %v537
      %v742 = vpop.f32.mrb[0].mxu0
      %v743 = vadd.f32 0.0, %v742
      %v744 = vpop.f32.mrb[0].mxu0
      %745 = vmatprep.mubr.f32.mxu0 0.0
      %746 = vmatmul.mubr.f32.gmra.mrb[0].mxu0 %v539
      %v747 = vpop.f32.mrb[0].mxu0
      %v748 = vadd.f32 0.0, %v747
      %v749 = vpop.f32.mrb[0].mxu0
      %750 = vmatprep.mubr.f32.mxu0 0.0
      %751 = vmatmul.mubr.f32.gmra.mrb[0].mxu0 %v649
      %v752 = vpop.f32.mrb[0].mxu0
      %v753 = vadd.f32 0.0, %v752
      %v754 = vpop.f32.mrb[0].mxu0
      %755 = vdwg.mxu0
      %v756 = vadd.f32 %v608, %v718
      %v757 = vadd.f32 %v613, %v723
      %v758 = vadd.f32 %v618, %v728
      %v759 = vadd.f32 %v623, %v733
      %v760 = vadd.f32 %v628, %v738
      %v761 = vadd.f32 %v633, %v743
      %v762 = vadd.f32 %v638, %v748
      %v763 = vadd.f32 %v643, %v753
      %v765 = vrot.slane %v356, 1
      %v766 = vrot.slane %v357, 1
      %v767 = vsel %vm376, %v765, %v766
      %v768 = vld [vmem:[%s2 + $0x30] sm:$0xff]
      %v769 = vld [vmem:[%s2 + $0x38] sm:$0xff]
      %v770 = vsel %vm403, %v767, 0
      %772 = vmatprep.subr.mxu0 0.0
      %773 = vmatpush1.msra.mxu0 %v768
      %774 = vmatprep.subr.mxu0 0.0
      %775 = vmatpush1.msra.mxu0 %v769
      %776 = vmatprep.subr.mxu0 0.0
      %777 = vmatpush1.msra.mxu0 0.0
      %778 = vmatprep.subr.mxu0 0.0
      %779 = vmatpush1.msra.mxu0 0.0
      %780 = vmatprep.subr.mxu0 0.0
      %781 = vmatpush1.msra.mxu0 0.0
      %782 = vmatprep.subr.mxu0 0.0
      %783 = vmatpush1.msra.mxu0 0.0
      %784 = vmatprep.subr.mxu0 0.0
      %785 = vmatpush1.msra.mxu0 0.0
      %786 = vmatprep.subr.mxu0 0.0
      %787 = vmatpush1.msra.mxu0 0.0
      %788 = vmatprep.subr.mxu0 0.0
      %789 = vmatpush1.msra.mxu0 0.0
      %790 = vmatprep.subr.mxu0 0.0
      %791 = vmatpush1.msra.mxu0 0.0
      %792 = vmatprep.subr.mxu0 0.0
      %793 = vmatpush1.msra.mxu0 0.0
      %794 = vmatprep.subr.mxu0 0.0
      %795 = vmatpush1.msra.mxu0 0.0
      %796 = vmatprep.subr.mxu0 0.0
      %797 = vmatpush1.msra.mxu0 0.0
      %798 = vmatprep.subr.mxu0 0.0
      %799 = vmatpush1.msra.mxu0 0.0
      %800 = vmatprep.subr.mxu0 0.0
      %801 = vmatpush1.msra.mxu0 0.0
      %802 = vmatprep.subr.mxu0 0.0
      %803 = vmatpush1.msra.mxu0 0.0
      %804 = vmatprep.subr.mxu0 0.0
      %805 = vmatpush1.msra.mxu0 0.0
      %806 = vmatprep.subr.mxu0 0.0
      %807 = vmatpush1.msra.mxu0 0.0
      %808 = vmatprep.subr.mxu0 0.0
      %809 = vmatpush1.msra.mxu0 0.0
      %810 = vmatprep.subr.mxu0 0.0
      %811 = vmatpush1.msra.mxu0 0.0
      %812 = vmatprep.subr.mxu0 0.0
      %813 = vmatpush1.msra.mxu0 0.0
      %814 = vmatprep.subr.mxu0 0.0
      %815 = vmatpush1.msra.mxu0 0.0
      %816 = vmatprep.subr.mxu0 0.0
      %817 = vmatpush1.msra.mxu0 0.0
      %818 = vmatprep.subr.mxu0 0.0
      %819 = vmatpush1.msra.mxu0 0.0
      %820 = vmatprep.subr.mxu0 0.0
      %821 = vmatpush1.msra.mxu0 0.0
      %822 = vmatprep.subr.mxu0 0.0
      %823 = vmatpush1.msra.mxu0 0.0
      %824 = vmatprep.subr.mxu0 0.0
      %825 = vmatpush1.msra.mxu0 0.0
      %826 = vmatprep.subr.mxu0 0.0
      %827 = vmatpush1.msra.mxu0 0.0
      %828 = vmatprep.subr.mxu0 0.0
      %829 = vmatpush1.msra.mxu0 0.0
      %830 = vmatprep.subr.mxu0 0.0
      %831 = vmatpush1.msra.mxu0 0.0
      %832 = vmatprep.subr.mxu0 0.0
      %833 = vmatpush1.msra.mxu0 0.0
      %834 = vmatprep.subr.mxu0 0.0
      %835 = vmatpush1.msra.mxu0 0.0
      %836 = vmatprep.mubr.f32.mxu0 0.0
      %837 = vmatmul.mubr.f32.gmra.mrb[0].mxu0 %v406
      %v838 = vpop.f32.mrb[0].mxu0
      %v839 = vadd.f32 0.0, %v838
      %v840 = vpop.f32.mrb[0].mxu0
      %841 = vmatprep.mubr.f32.mxu0 0.0
      %842 = vmatmul.mubr.f32.gmra.mrb[0].mxu0 %v408
      %v843 = vpop.f32.mrb[0].mxu0
      %v844 = vadd.f32 0.0, %v843
      %v845 = vpop.f32.mrb[0].mxu0
      %846 = vmatprep.mubr.f32.mxu0 0.0
      %847 = vmatmul.mubr.f32.gmra.mrb[0].mxu0 %v410
      %v848 = vpop.f32.mrb[0].mxu0
      %v849 = vadd.f32 0.0, %v848
      %v850 = vpop.f32.mrb[0].mxu0
      %851 = vmatprep.mubr.f32.mxu0 0.0
      %852 = vmatmul.mubr.f32.gmra.mrb[0].mxu0 %v412
      %v853 = vpop.f32.mrb[0].mxu0
      %v854 = vadd.f32 0.0, %v853
      %v855 = vpop.f32.mrb[0].mxu0
      %856 = vmatprep.mubr.f32.mxu0 0.0
      %857 = vmatmul.mubr.f32.gmra.mrb[0].mxu0 %v414
      %v858 = vpop.f32.mrb[0].mxu0
      %v859 = vadd.f32 0.0, %v858
      %v860 = vpop.f32.mrb[0].mxu0
      %861 = vmatprep.mubr.f32.mxu0 0.0
      %862 = vmatmul.mubr.f32.gmra.mrb[0].mxu0 %v416
      %v863 = vpop.f32.mrb[0].mxu0
      %v864 = vadd.f32 0.0, %v863
      %v865 = vpop.f32.mrb[0].mxu0
      %866 = vmatprep.mubr.f32.mxu0 0.0
      %867 = vmatmul.mubr.f32.gmra.mrb[0].mxu0 %v418
      %v868 = vpop.f32.mrb[0].mxu0
      %v869 = vadd.f32 0.0, %v868
      %v870 = vpop.f32.mrb[0].mxu0
      %871 = vmatprep.mubr.f32.mxu0 0.0
      %872 = vmatmul.mubr.f32.gmra.mrb[0].mxu0 %v770
      %v873 = vpop.f32.mrb[0].mxu0
      %v874 = vadd.f32 0.0, %v873
      %v875 = vpop.f32.mrb[0].mxu0
      %876 = vdwg.mxu0
      %v877 = vadd.f32 %v756, %v839
      %v878 = vadd.f32 %v757, %v844
      %v879 = vadd.f32 %v758, %v849
      %v880 = vadd.f32 %v759, %v854
      %v881 = vadd.f32 %v760, %v859
      %v882 = vadd.f32 %v761, %v864
      %v883 = vadd.f32 %v762, %v869
      %v884 = vadd.f32 %v763, %v874
      %v885 = vld [vmem:[%s3] sm:$0x1]
      %v887 = vlaneseq
      %v888 = vshrl.u32 %v887, 7
      %v889 = vsub.s32 0, %v888
      %v890 = vrot.slane %v885, %v889
      %v892 = vmul.f32 %v877, %v890
      %v893 = vmul.f32 %v878, %v890
      %v894 = vmul.f32 %v879, %v890
      %v895 = vmul.f32 %v880, %v890
      %v896 = vmul.f32 %v881, %v890
      %v897 = vmul.f32 %v882, %v890
      %v898 = vmul.f32 %v883, %v890
      %v899 = vmul.f32 %v884, %v890
      %v900 = vld [vmem:[%s4] sm:$0x1]
      %v902 = vlaneseq
      %v903 = vshrl.u32 %v902, 7
      %v904 = vsub.s32 0, %v903
      %v905 = vrot.slane %v900, %v904
      %v907 = vadd.f32 %v892, %v905
      %v908 = vadd.f32 %v893, %v905
      %v909 = vadd.f32 %v894, %v905
      %v910 = vadd.f32 %v895, %v905
      %v911 = vadd.f32 %v896, %v905
      %v912 = vadd.f32 %v897, %v905
      %v913 = vadd.f32 %v898, %v905
      %v914 = vadd.f32 %v899, %v905
      %v915 = vmax.f32 %v907, 0.0
      %v916 = vmax.f32 %v908, 0.0
      %v917 = vmax.f32 %v909, 0.0
      %v918 = vmax.f32 %v910, 0.0
      %v919 = vmax.f32 %v911, 0.0
      %v920 = vmax.f32 %v912, 0.0
      %v921 = vmax.f32 %v913, 0.0
      %v922 = vmax.f32 %v914, 0.0
      %vm923 = vcmask 64512
      %924 = vst.msk [vmem:[%s338] sm:$0xff] %vm923, %v915
      %925 = vst.msk [vmem:[%s338 + $0x8] sm:$0xff] %vm923, %v916
      %926 = vst.msk [vmem:[%s338 + $0x10] sm:$0xff] %vm923, %v917
      %927 = vst.msk [vmem:[%s338 + $0x18] sm:$0xff] %vm923, %v918
      %928 = vst.msk [vmem:[%s338 + $0x20] sm:$0xff] %vm923, %v919
      %929 = vst.msk [vmem:[%s338 + $0x28] sm:$0xff] %vm923, %v920
      %930 = vst.msk [vmem:[%s338 + $0x30] sm:$0xff] %vm923, %v921
      %931 = vst.msk [vmem:[%s338 + $0x38] sm:$0xff] %vm923, %v922
      %s932 = smul.u32 8, %s21
      %p933 = scmp.lt.s32.totalorder %s20, 1
      %s934 = scalar_select %p933, %s20, 1
      %p935 = scmp.lt.s32.totalorder %s932, 7
      %s936 = scalar_select %p935, %s932, 7
      %s937 = smul.addr %s934, 8
      %s938 = sadd.s32 %s936, %s937
      %s939 = smul.addr %s938, 8
      %s940 = scalar_lea.vmem %s5, %s939
      // Predicated region
      $region41: #{_lambda_.1} parent=39 // pred_check
        %p941 = pneg %p171
      $region42: #{_lambda_.1} parent=39 // pred_check_branch
        %943 = sbr.rel (%p941) target = $region44
      $region43: #{_lambda_.1} parent=39 // pred_region
        %s944 = smul.u32 8, %s21
      $region44: #{_lambda_.1} parent=39 // pred_fallthru
        _
    $region40: #{_lambda_.1} parent=5 // pred_fallthru
      _
    %p945 = scmp.le.s32.totalorder 2, %s11
    // Predicated region
    $region45: #{_lambda_.1} parent=5 // pred_check
      %p946 = pneg %p945
    $region46: #{_lambda_.1} parent=5 // pred_check_branch
      %948 = sbr.rel (%p946) target = $region48
    $region47: #{_lambda_.1} parent=5 // pred_region
      %s949 = ssub.s32 %s11, 2
      // Predicated region
      $region49: #{_lambda_.1} parent=47 // pred_check
        %p950 = pneg %p177
      $region50: #{_lambda_.1} parent=47 // pred_check_branch
        %952 = sbr.rel (%p950) target = $region52
      $region51: #{_lambda_.1} parent=47 // pred_region
        %s953 = smul.u32 8, %s23
        %p954 = scmp.lt.s32.totalorder %s22, 1
        %s955 = scalar_select %p954, %s22, 1
        %p956 = scmp.lt.s32.totalorder %s953, 7
        %s957 = scalar_select %p956, %s953, 7
        %s958 = smul.addr %s955, 8
        %s959 = sadd.s32 %s957, %s958
        %s960 = smul.addr %s959, 8
        %s961 = scalar_lea.vmem %s5, %s960
      $region52: #{_lambda_.1} parent=47 // pred_fallthru
        _
    $region48: #{_lambda_.1} parent=5 // pred_fallthru
      _
  $region6: #{_lambda_.1} parent=0 // loop_footer
    %s15 = sadd.s32 1, %s11
  $region7: #{_lambda_.1} parent=0 // loop_footer_branch
    %10 = sbr.rel target = $region3
  $region8: #{_lambda_.1} parent=0 // loop_exit
    _

</llo_original>
